<compile_context>
chip_gen: v6e
topology: v6e:2x2x1
jax: 0.10.0
libtpu: 0.0.40
codegen_flags: <defaults>
</compile_context>

<pallas_src>
import functools

import jax
import jax.numpy as jnp
from jax.experimental import pallas as pl
from jax.experimental.pallas import tpu as pltpu


def _round_up(a, b):
    return (a + b - 1) // b * b


def _triplet_wrt_kernel(x_tile_ref, x_full_ref, sq_all_ref, t_col_ref, t_row_ref,
                        valid_ref, loss_ref, correct_ref, *, matmul_dtype):
    x_tile = x_tile_ref[...]                                   # (TM, D) f32
    x_full = x_full_ref[...]                                   # (Np, D) f32

    # Gram tile on the MXU: (TM, Np). Contract feature dim of both operands
    # (A @ B.T pattern, no explicit transpose).
    gram = jax.lax.dot_general(
        x_tile.astype(matmul_dtype), x_full.astype(matmul_dtype),
        (((1,), (1,)), ((), ())),
        preferred_element_type=jnp.float32,
    )

    # Squared norms: row norms via a lane reduction on the tile, column norms
    # precomputed in the wrapper (O(N*D), passed as a (1, Np) vector).
    sq_row = jnp.sum(x_tile * x_tile, axis=1, keepdims=True)   # (TM, 1)
    sq_col = sq_all_ref[...]                                   # (1, Np)

    dist = jnp.sqrt(jnp.maximum(sq_row + sq_col - 2.0 * gram, 1e-12))  # (TM, Np)

    # Integer label comparison (no f32 cast) + validity mask for padded columns.
    valid = valid_ref[...] > 0                                 # (1, Np) bool
    same = t_col_ref[...] == t_row_ref[...]                    # (TM, Np) bool
    pos_mask = jnp.logical_and(same, valid)
    neg_mask = jnp.logical_and(jnp.logical_not(same), valid)

    dist_ap = jnp.where(pos_mask, dist, 0.0)
    dist_an = jnp.where(neg_mask, dist, 0.0)

    # softmax_weights(dist_ap, is_pos) folded into a weighted row-sum
    # (no (TM, Np) weight matrix, no full-width divide; dist_ap already masked,
    # so no re-masking inside the max).
    max_ap = jnp.max(dist_ap, axis=1, keepdims=True)
    exp_ap = jnp.where(pos_mask, jnp.exp(dist_ap - max_ap), 0.0)
    den_ap = jnp.sum(exp_ap, axis=1, keepdims=True) + 1e-6
    num_ap = jnp.sum(dist_ap * exp_ap, axis=1, keepdims=True)
    furthest_positive = num_ap / den_ap                        # (TM, 1)

    # softmax_weights(-dist_an, is_neg)
    max_an = jnp.max(-dist_an, axis=1, keepdims=True)
    exp_an = jnp.where(neg_mask, jnp.exp(-dist_an - max_an), 0.0)
    den_an = jnp.sum(exp_an, axis=1, keepdims=True) + 1e-6
    num_an = jnp.sum(dist_an * exp_an, axis=1, keepdims=True)
    closest_negative = num_an / den_an                         # (TM, 1)

    diff = closest_negative - furthest_positive                # (TM, 1)

    # SoftMarginLoss with target y = 1 (per-sample; mean happens in wrapper).
    loss_ref[...] = jnp.log1p(jnp.exp(-diff))
    correct_ref[...] = (closest_negative >= furthest_positive).astype(jnp.float32)


def triplet_loss_wrt(inputs, targets, normalize_feature=False,
                     matmul_dtype=jnp.float32):
    """JAX/Pallas equivalent of TripletLoss_WRT.forward.

    Returns (loss: f32 scalar, correct: int32 scalar).
    `matmul_dtype=jnp.bfloat16` gives ~2x MXU throughput at ~1e-3 relative
    distance error; keep float32 (default) for parity with the f32 reference.
    """
    if normalize_feature:
        # glue: unit-length normalization along feature dim (plain JAX).
        inputs = inputs / (jnp.linalg.norm(inputs, axis=-1, keepdims=True) + 1e-12)

    inputs = inputs.astype(jnp.float32)
    n, d = inputs.shape
    targets = targets.astype(jnp.int32)

    # Row tile: multiple of 8 sublanes, capped at 128 (MXU-friendly).
    tm = min(128, _round_up(n, 8))
    n_pad = _round_up(n, tm)
    num_tiles = n_pad // tm

    pad = n_pad - n
    if pad:
        x_pad = jnp.pad(inputs, ((0, pad), (0, 0)))
        t_pad = jnp.pad(targets, (0, pad))
    else:
        x_pad, t_pad = inputs, targets

    sq_all = jnp.sum(x_pad * x_pad, axis=1)[None, :]             # (1, n_pad)
    valid = (jnp.arange(n_pad) < n).astype(jnp.int32)[None, :]   # (1, n_pad)
    t_col = t_pad.reshape(n_pad, 1)
    t_row = t_pad.reshape(1, n_pad)

    kernel = functools.partial(_triplet_wrt_kernel, matmul_dtype=matmul_dtype)

    loss_i, correct_i = pl.pallas_call(
        kernel,
        out_shape=(
            jax.ShapeDtypeStruct((n_pad, 1), jnp.float32),
            jax.ShapeDtypeStruct((n_pad, 1), jnp.float32),
        ),
        grid=(num_tiles,),
        in_specs=[
            pl.BlockSpec((tm, d), lambda i: (i, 0)),        # x row tile (pipelined)
            pl.BlockSpec((n_pad, d), lambda i: (0, 0)),     # full x (resident)
            pl.BlockSpec((1, n_pad), lambda i: (0, 0)),     # column squared norms
            pl.BlockSpec((tm, 1), lambda i: (i, 0)),        # labels, column form
            pl.BlockSpec((1, n_pad), lambda i: (0, 0)),     # labels, row form
            pl.BlockSpec((1, n_pad), lambda i: (0, 0)),     # valid-column mask
        ],
        out_specs=(
            pl.BlockSpec((tm, 1), lambda i: (i, 0)),        # per-sample loss
            pl.BlockSpec((tm, 1), lambda i: (i, 0)),        # per-sample correct
        ),
        compiler_params=pltpu.CompilerParams(
            dimension_semantics=("parallel",),
        ),
    )(x_pad, x_pad, sq_all, t_col, t_row, valid)

    # Tiny O(N) final reduction in plain JAX (drops padded rows).
    loss = jnp.sum(loss_i[:n, 0]) / float(n)
    correct = jnp.sum(correct_i[:n, 0]).astype(jnp.int32)
    return loss, correct


# --- pure-JAX reference (mirrors the PyTorch code) for correctness check ---
def _reference(inputs, targets, normalize_feature=False):
    if normalize_feature:
        inputs = inputs / (jnp.linalg.norm(inputs, axis=-1, keepdims=True) + 1e-12)
    sq = jnp.sum(inputs ** 2, axis=1, keepdims=True)
    dist = sq + sq.T - 2.0 * inputs @ inputs.T
    dist = jnp.sqrt(jnp.clip(dist, 1e-12, None))
    is_pos = (targets[None, :] == targets[:, None]).astype(jnp.float32)
    is_neg = 1.0 - is_pos
    dist_ap = dist * is_pos
    dist_an = dist * is_neg

    def softmax_weights(d, mask):
        max_v = jnp.max(d * mask, axis=1, keepdims=True)
        diff = d - max_v
        z = jnp.sum(jnp.exp(diff) * mask, axis=1, keepdims=True) + 1e-6
        return jnp.exp(diff) * mask / z

    w_ap = softmax_weights(dist_ap, is_pos)
    w_an = softmax_weights(-dist_an, is_neg)
    fp = jnp.sum(dist_ap * w_ap, axis=1)
    cn = jnp.sum(dist_an * w_an, axis=1)
    loss = jnp.mean(jnp.log1p(jnp.exp(-(cn - fp))))
    correct = jnp.sum(cn >= fp).astype(jnp.int32)
    return loss, correct


if __name__ == "__main__":
    key = jax.random.PRNGKey(0)
    N, D = 8, 32
    k1, _ = jax.random.split(key)
    inputs = jax.random.normal(k1, (N, D), dtype=jnp.float32)
    # 4 identities, 2 samples each.
    targets = jnp.array([0, 0, 1, 1, 2, 2, 3, 3], dtype=jnp.int32)

    loss, correct = triplet_loss_wrt(inputs, targets, normalize_feature=False)
    loss = jax.block_until_ready(loss)
    correct = jax.block_until_ready(correct)

    ref_loss, ref_correct = _reference(inputs, targets)
    assert jnp.allclose(loss, ref_loss, rtol=1e-5, atol=1e-5), (loss, ref_loss)
    assert int(correct) == int(ref_correct), (correct, ref_correct)

    print("KERNEL_OK")
</pallas_src>

<mosaic_0001>
module attributes {stable_mosaic.version = 11 : i64} {
  func.func @_triplet_wrt_kernel(%arg0: i32, %arg1: memref<8x32xf32, #tpu.memory_space<vmem>>, %arg2: memref<8x32xf32, #tpu.memory_space<vmem>>, %arg3: memref<1x8xf32, #tpu.memory_space<vmem>>, %arg4: memref<8x1xi32, #tpu.memory_space<vmem>>, %arg5: memref<1x8xi32, #tpu.memory_space<vmem>>, %arg6: memref<1x8xi32, #tpu.memory_space<vmem>>, %arg7: memref<8x1xf32, #tpu.memory_space<vmem>>, %arg8: memref<8x1xf32, #tpu.memory_space<vmem>>) attributes {dimension_semantics = [#tpu.dimension_semantics<parallel>], iteration_bounds = array<i64: 1>, scalar_prefetch = 0 : i64, scratch_operands = 0 : i64, tpu.core_type = #tpu.core_type<tc>, window_params = [{transform_indices = @transform_0, window_bounds = array<i64: 8, 32>}, {pipeline_mode = #tpu.pipeline_mode<synchronous>, transform_indices = @transform_1, window_bounds = array<i64: 8, 32>}, {pipeline_mode = #tpu.pipeline_mode<synchronous>, transform_indices = @transform_2, window_bounds = array<i64: 1, 8>}, {transform_indices = @transform_3, window_bounds = array<i64: 8, 1>}, {pipeline_mode = #tpu.pipeline_mode<synchronous>, transform_indices = @transform_4, window_bounds = array<i64: 1, 8>}, {pipeline_mode = #tpu.pipeline_mode<synchronous>, transform_indices = @transform_5, window_bounds = array<i64: 1, 8>}, {transform_indices = @transform_6, window_bounds = array<i64: 8, 1>}, {transform_indices = @transform_7, window_bounds = array<i64: 8, 1>}]} {
    %c0 = arith.constant 0 : index
    %c0_0 = arith.constant 0 : index
    %0 = vector.load %arg1[%c0, %c0_0] : memref<8x32xf32, #tpu.memory_space<vmem>>, vector<8x32xf32>
    %c0_1 = arith.constant 0 : index
    %c0_2 = arith.constant 0 : index
    %1 = vector.load %arg2[%c0_1, %c0_2] : memref<8x32xf32, #tpu.memory_space<vmem>>, vector<8x32xf32>
    %cst = arith.constant dense<0.000000e+00> : vector<8x8xf32>
    %2 = tpu.matmul %0, %1, %cst {dimension_numbers = #tpu.dot_dimension_numbers<[1], [1], [0], [0], [0, 0, 1, 0], [], []>} : vector<8x32xf32>, vector<8x32xf32>, vector<8x8xf32> -> vector<8x8xf32>
    %3 = arith.mulf %0, %0 : vector<8x32xf32>
    %cst_3 = arith.constant dense<0.000000e+00> : vector<8xf32>
    %4 = vector.multi_reduction <add>, %3, %cst_3 [1] : vector<8x32xf32> to vector<8xf32>
    %5 = vector.shape_cast %4 : vector<8xf32> to vector<8x1xf32>
    %c0_4 = arith.constant 0 : index
    %c0_5 = arith.constant 0 : index
    %6 = vector.load %arg3[%c0_4, %c0_5] : memref<1x8xf32, #tpu.memory_space<vmem>>, vector<1x8xf32>
    %7 = vector.broadcast %5 : vector<8x1xf32> to vector<8x8xf32>
    %8 = vector.broadcast %6 : vector<1x8xf32> to vector<8x8xf32>
    %9 = arith.addf %7, %8 : vector<8x8xf32>
    %cst_6 = arith.constant 2.000000e+00 : f32
    %10 = vector.broadcast %cst_6 : f32 to vector<8x8xf32>
    %11 = arith.mulf %10, %2 : vector<8x8xf32>
    %12 = arith.subf %9, %11 : vector<8x8xf32>
    %cst_7 = arith.constant 9.99999996E-13 : f32
    %13 = vector.broadcast %cst_7 : f32 to vector<8x8xf32>
    %14 = arith.maximumf %12, %13 : vector<8x8xf32>
    %15 = math.sqrt %14 : vector<8x8xf32>
    %c0_8 = arith.constant 0 : index
    %c0_9 = arith.constant 0 : index
    %16 = vector.load %arg6[%c0_8, %c0_9] : memref<1x8xi32, #tpu.memory_space<vmem>>, vector<1x8xi32>
    %c0_i32 = arith.constant 0 : i32
    %17 = vector.broadcast %c0_i32 : i32 to vector<1x8xi32>
    %18 = arith.cmpi sgt, %16, %17 : vector<1x8xi32>
    %c0_10 = arith.constant 0 : index
    %c0_11 = arith.constant 0 : index
    %19 = vector.load %arg4[%c0_10, %c0_11] : memref<8x1xi32, #tpu.memory_space<vmem>>, vector<8x1xi32>
    %c0_12 = arith.constant 0 : index
    %c0_13 = arith.constant 0 : index
    %20 = vector.load %arg5[%c0_12, %c0_13] : memref<1x8xi32, #tpu.memory_space<vmem>>, vector<1x8xi32>
    %21 = vector.broadcast %19 : vector<8x1xi32> to vector<8x8xi32>
    %22 = vector.broadcast %20 : vector<1x8xi32> to vector<8x8xi32>
    %23 = arith.cmpi eq, %21, %22 : vector<8x8xi32>
    %24 = vector.broadcast %18 : vector<1x8xi1> to vector<8x8xi1>
    %25 = arith.andi %23, %24 : vector<8x8xi1>
    %cst_14 = arith.constant dense<true> : vector<8x8xi1>
    %26 = arith.xori %23, %cst_14 : vector<8x8xi1>
    %27 = vector.broadcast %18 : vector<1x8xi1> to vector<8x8xi1>
    %28 = arith.andi %26, %27 : vector<8x8xi1>
    %cst_15 = arith.constant 0.000000e+00 : f32
    %29 = vector.broadcast %cst_15 : f32 to vector<8x8xf32>
    %30 = arith.select %25, %15, %29 : vector<8x8xi1>, vector<8x8xf32>
    %cst_16 = arith.constant 0.000000e+00 : f32
    %31 = vector.broadcast %cst_16 : f32 to vector<8x8xf32>
    %32 = arith.select %28, %15, %31 : vector<8x8xi1>, vector<8x8xf32>
    %cst_17 = arith.constant dense<0xFF800000> : vector<8xf32>
    %33 = vector.multi_reduction <maximumf>, %30, %cst_17 [1] : vector<8x8xf32> to vector<8xf32>
    %34 = vector.shape_cast %33 : vector<8xf32> to vector<8x1xf32>
    %35 = vector.broadcast %34 : vector<8x1xf32> to vector<8x8xf32>
    %36 = arith.subf %30, %35 : vector<8x8xf32>
    %37 = math.exp %36 : vector<8x8xf32>
    %cst_18 = arith.constant 0.000000e+00 : f32
    %38 = vector.broadcast %cst_18 : f32 to vector<8x8xf32>
    %39 = arith.select %25, %37, %38 : vector<8x8xi1>, vector<8x8xf32>
    %cst_19 = arith.constant dense<0.000000e+00> : vector<8xf32>
    %40 = vector.multi_reduction <add>, %39, %cst_19 [1] : vector<8x8xf32> to vector<8xf32>
    %41 = vector.shape_cast %40 : vector<8xf32> to vector<8x1xf32>
    %cst_20 = arith.constant 9.99999997E-7 : f32
    %42 = vector.broadcast %cst_20 : f32 to vector<8x1xf32>
    %43 = arith.addf %41, %42 : vector<8x1xf32>
    %44 = arith.mulf %30, %39 : vector<8x8xf32>
    %cst_21 = arith.constant dense<0.000000e+00> : vector<8xf32>
    %45 = vector.multi_reduction <add>, %44, %cst_21 [1] : vector<8x8xf32> to vector<8xf32>
    %46 = vector.shape_cast %45 : vector<8xf32> to vector<8x1xf32>
    %47 = arith.divf %46, %43 : vector<8x1xf32>
    %cst_22 = arith.constant 0.000000e+00 : f32
    %48 = vector.broadcast %cst_22 : f32 to vector<8x8xf32>
    %49 = arith.subf %48, %32 : vector<8x8xf32>
    %cst_23 = arith.constant dense<0xFF800000> : vector<8xf32>
    %50 = vector.multi_reduction <maximumf>, %49, %cst_23 [1] : vector<8x8xf32> to vector<8xf32>
    %51 = vector.shape_cast %50 : vector<8xf32> to vector<8x1xf32>
    %cst_24 = arith.constant 0.000000e+00 : f32
    %52 = vector.broadcast %cst_24 : f32 to vector<8x8xf32>
    %53 = arith.subf %52, %32 : vector<8x8xf32>
    %54 = vector.broadcast %51 : vector<8x1xf32> to vector<8x8xf32>
    %55 = arith.subf %53, %54 : vector<8x8xf32>
    %56 = math.exp %55 : vector<8x8xf32>
    %cst_25 = arith.constant 0.000000e+00 : f32
    %57 = vector.broadcast %cst_25 : f32 to vector<8x8xf32>
    %58 = arith.select %28, %56, %57 : vector<8x8xi1>, vector<8x8xf32>
    %cst_26 = arith.constant dense<0.000000e+00> : vector<8xf32>
    %59 = vector.multi_reduction <add>, %58, %cst_26 [1] : vector<8x8xf32> to vector<8xf32>
    %60 = vector.shape_cast %59 : vector<8xf32> to vector<8x1xf32>
    %cst_27 = arith.constant 9.99999997E-7 : f32
    %61 = vector.broadcast %cst_27 : f32 to vector<8x1xf32>
    %62 = arith.addf %60, %61 : vector<8x1xf32>
    %63 = arith.mulf %32, %58 : vector<8x8xf32>
    %cst_28 = arith.constant dense<0.000000e+00> : vector<8xf32>
    %64 = vector.multi_reduction <add>, %63, %cst_28 [1] : vector<8x8xf32> to vector<8xf32>
    %65 = vector.shape_cast %64 : vector<8xf32> to vector<8x1xf32>
    %66 = arith.divf %65, %62 : vector<8x1xf32>
    %67 = arith.subf %66, %47 : vector<8x1xf32>
    %cst_29 = arith.constant 0.000000e+00 : f32
    %68 = vector.broadcast %cst_29 : f32 to vector<8x1xf32>
    %69 = arith.subf %68, %67 : vector<8x1xf32>
    %70 = math.exp %69 : vector<8x1xf32>
    %71 = math.log1p %70 : vector<8x1xf32>
    %c0_30 = arith.constant 0 : index
    %c0_31 = arith.constant 0 : index
    %72 = vector.load %arg7[%c0_30, %c0_31] : memref<8x1xf32, #tpu.memory_space<vmem>>, vector<8x1xf32>
    tpu.vector_store %arg7[%c0_30, %c0_31], %71 {strides = array<i32>} : memref<8x1xf32, #tpu.memory_space<vmem>>, vector<8x1xf32>,
    %73 = arith.cmpf oge, %66, %47 : vector<8x1xf32>
    %74 = arith.extui %73 : vector<8x1xi1> to vector<8x1xi32>
    %75 = arith.sitofp %74 : vector<8x1xi32> to vector<8x1xf32>
    %c0_32 = arith.constant 0 : index
    %c0_33 = arith.constant 0 : index
    %76 = vector.load %arg8[%c0_32, %c0_33] : memref<8x1xf32, #tpu.memory_space<vmem>>, vector<8x1xf32>
    tpu.vector_store %arg8[%c0_32, %c0_33], %75 {strides = array<i32>} : memref<8x1xf32, #tpu.memory_space<vmem>>, vector<8x1xf32>,
    return
  }
  func.func @transform_0(%arg0: i32) -> (i32, i32) {
    %c0_i32 = arith.constant 0 : i32
    %c0_i32_0 = arith.constant 0 : i32
    return %arg0, %c0_i32 : i32, i32
  }
  func.func @transform_1(%arg0: i32) -> (i32, i32) {
    %c0_i32 = arith.constant 0 : i32
    %c0_i32_0 = arith.constant 0 : i32
    %c0_i32_1 = arith.constant 0 : i32
    return %c0_i32, %c0_i32_0 : i32, i32
  }
  func.func @transform_2(%arg0: i32) -> (i32, i32) {
    %c0_i32 = arith.constant 0 : i32
    %c0_i32_0 = arith.constant 0 : i32
    %c0_i32_1 = arith.constant 0 : i32
    return %c0_i32, %c0_i32_0 : i32, i32
  }
  func.func @transform_3(%arg0: i32) -> (i32, i32) {
    %c0_i32 = arith.constant 0 : i32
    %c0_i32_0 = arith.constant 0 : i32
    return %arg0, %c0_i32 : i32, i32
  }
  func.func @transform_4(%arg0: i32) -> (i32, i32) {
    %c0_i32 = arith.constant 0 : i32
    %c0_i32_0 = arith.constant 0 : i32
    %c0_i32_1 = arith.constant 0 : i32
    return %c0_i32, %c0_i32_0 : i32, i32
  }
  func.func @transform_5(%arg0: i32) -> (i32, i32) {
    %c0_i32 = arith.constant 0 : i32
    %c0_i32_0 = arith.constant 0 : i32
    %c0_i32_1 = arith.constant 0 : i32
    return %c0_i32, %c0_i32_0 : i32, i32
  }
  func.func @transform_6(%arg0: i32) -> (i32, i32) {
    %c0_i32 = arith.constant 0 : i32
    %c0_i32_0 = arith.constant 0 : i32
    return %arg0, %c0_i32 : i32, i32
  }
  func.func @transform_7(%arg0: i32) -> (i32, i32) {
    %c0_i32 = arith.constant 0 : i32
    %c0_i32_0 = arith.constant 0 : i32
    return %arg0, %c0_i32 : i32, i32
  }
}

</mosaic_0001>

<llo_original>
// kernel: tpu_custom_call.1
$region0: #{tpu_custom_call.1}
  #allocation0 [shape = 'u32[]', space=smem, size = 0x4, offset = 0x4, fixed_abs, tag = 'smem constant byte address 0x4 - core index']
  #allocation1 [shape = 'u32[144,128]{1,0:T(1,128)}', space=vmem, size = 0x12000, scoped, tag = 'internal scratch']
  %s0 = inlined_call_operand.vmem [shape: f32[8,32], index: 0, kind: input, shape index: {}]
  %s1 = inlined_call_operand.hbm [shape: f32[8,32], index: 1, kind: input, shape index: {}]
  %s2 = inlined_call_operand.vmem [shape: f32[1,8], index: 2, kind: input, shape index: {}]
  %s3 = inlined_call_operand.vmem [shape: s32[8,1], index: 3, kind: input, shape index: {}]
  %s4 = inlined_call_operand.vmem [shape: s32[1,8], index: 4, kind: input, shape index: {}]
  %s5 = inlined_call_operand.vmem [shape: s32[1,8], index: 5, kind: input, shape index: {}]
  %s6 = inlined_call_operand.vmem [shape: f32[8,1], index: 6, kind: output, shape index: {0}]
  %s7 = inlined_call_operand.vmem [shape: f32[8,1], index: 7, kind: output, shape index: {1}]
  %8 = xla_tuple %s6, %s7
  %s9 = sld [smem:[#allocation0]]
  $region46: #{tpu_custom_call.1} parent=0
    _
  %s11 = ssub.s32 1, %s9
  %s12 = scalar_select 0, %s11, %s9
  $region1: #{tpu_custom_call.1} parent=0
    #allocation2 [shape = 'u8[4096]{0}', space=vmem, size = 0x1000, scoped, tag = 'input window, operand 1, single buffered']
    #allocation3 [shape = 's32[1]{0}', space=sflag, size = 0x4, scoped, tag = 'scoped memory for tpu_custom_call.1']
    %13 = vsyncpa [#allocation3], 0
    // Predicated region
    $region2: #{tpu_custom_call.1} parent=1 // pred_check
      _
    $region3: #{tpu_custom_call.1} parent=1 // pred_check_branch
      %15 = sbr.rel (0) target = $region5
    $region4: #{tpu_custom_call.1} parent=1 // pred_region
      _
    $region5: #{tpu_custom_call.1} parent=1 // pred_fallthru
      _
    // Predicated region
    $region6: #{tpu_custom_call.1} parent=1 // pred_check
      _
    $region7: #{tpu_custom_call.1} parent=1 // pred_check_branch
      %17 = sbr.rel (0) target = $region9
    $region8: #{tpu_custom_call.1} parent=1 // pred_region
      %s19 = ssub.s32 128, 128
      %20 = vsyncadd [#allocation3], %s19
      %s22 = sshll.u32 [#allocation2], 4
      %s23 = int_to_ptr.vmem [resolvable:$true] %s22
      %25 = dma.hbm_to_vmem [thread:$0]  %s1, 128, %s23, [#allocation3]
    $region9: #{tpu_custom_call.1} parent=1 // pred_fallthru
      _
    // Predicated region
    $region10: #{tpu_custom_call.1} parent=1 // pred_check
      _
    $region11: #{tpu_custom_call.1} parent=1 // pred_check_branch
      %27 = sbr.rel (0) target = $region13
    $region12: #{tpu_custom_call.1} parent=1 // pred_region
      _
    $region13: #{tpu_custom_call.1} parent=1 // pred_fallthru
      _
    // Predicated region
    $region14: #{tpu_custom_call.1} parent=1 // pred_check
      _
    $region15: #{tpu_custom_call.1} parent=1 // pred_check_branch
      %29 = sbr.rel (0) target = $region17
    $region16: #{tpu_custom_call.1} parent=1 // pred_region
      _
    $region17: #{tpu_custom_call.1} parent=1 // pred_fallthru
      _
    // Predicated region
    $region18: #{tpu_custom_call.1} parent=1 // pred_check
      _
    $region19: #{tpu_custom_call.1} parent=1 // pred_check_branch
      %31 = sbr.rel (0) target = $region21
    $region20: #{tpu_custom_call.1} parent=1 // pred_region
      _
    $region21: #{tpu_custom_call.1} parent=1 // pred_fallthru
      _
    // Predicated region
    $region22: #{tpu_custom_call.1} parent=1 // pred_check
      _
    $region23: #{tpu_custom_call.1} parent=1 // pred_check_branch
      %33 = sbr.rel (0) target = $region25
    $region24: #{tpu_custom_call.1} parent=1 // pred_region
      _
    $region25: #{tpu_custom_call.1} parent=1 // pred_fallthru
      _
    // Predicated region
    $region26: #{tpu_custom_call.1} parent=1 // pred_check
      _
    $region27: #{tpu_custom_call.1} parent=1 // pred_check_branch
      %35 = sbr.rel (0) target = $region29
    $region28: #{tpu_custom_call.1} parent=1 // pred_region
      %36 = dma.done [#allocation3], 128
    $region29: #{tpu_custom_call.1} parent=1 // pred_fallthru
      _
    %v37 = vld [vmem:[%s0] sm:$0xff]
    %v38 = vld [vmem:[#allocation2] sm:$0xff]
    %vm39 = vcmask 261120
    %v41 = vsel %vm39, %v37, 0
    %v44 = vsel %vm39, %v38, 0
    %46 = vmatprep.subr.mxu0 0.0
    %47 = vmatpush1.xpose.msra.mxu0 0.0
    %48 = vmatprep.subr.mxu0 0.0
    %49 = vmatpush1.xpose.msra.mxu0 0.0
    %50 = vmatprep.subr.mxu0 0.0
    %51 = vmatpush1.xpose.msra.mxu0 0.0
    %52 = vmatprep.subr.mxu0 0.0
    %53 = vmatpush1.xpose.msra.mxu0 0.0
    %54 = vmatprep.subr.mxu0 0.0
    %55 = vmatpush1.xpose.msra.mxu0 0.0
    %56 = vmatprep.subr.mxu0 0.0
    %57 = vmatpush1.xpose.msra.mxu0 0.0
    %58 = vmatprep.subr.mxu0 0.0
    %59 = vmatpush1.xpose.msra.mxu0 0.0
    %60 = vmatprep.subr.mxu0 0.0
    %61 = vmatpush1.xpose.msra.mxu0 0.0
    %62 = vmatprep.subr.mxu0 0.0
    %63 = vmatpush1.xpose.msra.mxu0 0.0
    %64 = vmatprep.subr.mxu0 0.0
    %65 = vmatpush1.xpose.msra.mxu0 0.0
    %66 = vmatprep.subr.mxu0 0.0
    %67 = vmatpush1.xpose.msra.mxu0 0.0
    %68 = vmatprep.subr.mxu0 0.0
    %69 = vmatpush1.xpose.msra.mxu0 0.0
    %70 = vmatprep.subr.mxu0 0.0
    %71 = vmatpush1.xpose.msra.mxu0 0.0
    %72 = vmatprep.subr.mxu0 0.0
    %73 = vmatpush1.xpose.msra.mxu0 0.0
    %74 = vmatprep.subr.mxu0 0.0
    %75 = vmatpush1.xpose.msra.mxu0 0.0
    %76 = vmatprep.subr.mxu0 0.0
    %77 = vmatpush1.xpose.msra.mxu0 %v44
    %78 = vmatprep.subr.mxu0 0.0
    %79 = vmatpush2.xpose.msra.mxu0 0.0
    %80 = vmatprep.subr.mxu0 0.0
    %81 = vmatpush2.xpose.msra.mxu0 0.0
    %82 = vmatprep.subr.mxu0 0.0
    %83 = vmatpush2.xpose.msra.mxu0 0.0
    %84 = vmatprep.subr.mxu0 0.0
    %85 = vmatpush2.xpose.msra.mxu0 0.0
    %86 = vmatprep.subr.mxu0 0.0
    %87 = vmatpush2.xpose.msra.mxu0 0.0
    %88 = vmatprep.subr.mxu0 0.0
    %89 = vmatpush2.xpose.msra.mxu0 0.0
    %90 = vmatprep.subr.mxu0 0.0
    %91 = vmatpush2.xpose.msra.mxu0 0.0
    %92 = vmatprep.subr.mxu0 0.0
    %93 = vmatpush2.xpose.msra.mxu0 0.0
    %94 = vmatprep.subr.mxu0 0.0
    %95 = vmatpush2.xpose.msra.mxu0 0.0
    %96 = vmatprep.subr.mxu0 0.0
    %97 = vmatpush2.xpose.msra.mxu0 0.0
    %98 = vmatprep.subr.mxu0 0.0
    %99 = vmatpush2.xpose.msra.mxu0 0.0
    %100 = vmatprep.subr.mxu0 0.0
    %101 = vmatpush2.xpose.msra.mxu0 0.0
    %102 = vmatprep.subr.mxu0 0.0
    %103 = vmatpush2.xpose.msra.mxu0 0.0
    %104 = vmatprep.subr.mxu0 0.0
    %105 = vmatpush2.xpose.msra.mxu0 0.0
    %106 = vmatprep.subr.mxu0 0.0
    %107 = vmatpush2.xpose.msra.mxu0 0.0
    %108 = vmatprep.subr.mxu0 0.0
    %109 = vmatpush2.xpose.msra.mxu0 0.0
    %110 = vmatprep.mubr.f32.mxu0 0.0
    %111 = vmatmul.mubr.f32.gmra.mxu0 %v41
    %v112 = vpop.f32.mrf.mxu0
    %v113 = vadd.f32 0.0, %v112
    %v114 = vpop.f32.mrf.mxu0
    %115 = vdwg.mxu0
    %v116 = vmul.f32 %v37, %v37
    %v117 = vsel %vm39, %v116, 0.0
    %118 = vadd.xlane.f32.xlu0 %v117
    %v119 = vpop.xlane.xlu0 %118
    %v120 = vld [vmem:[%s2] sm:$0x1]
    %v122 = vlaneseq
    %v123 = vshrl.u32 %v122, 7
    %v124 = vsub.s32 0, %v123
    %v125 = vrot.slane %v120, %v124
    %v127 = vadd.f32 %v119, %v125
    %v128 = vmul.f32 %v113, 2.0
    %v129 = vsub.f32 %v127, %v128
    %v130 = vmax.f32 %v129, 1e-12
    %v131 = vrsqrt.pop %v130
    %v132 = vmul.f32 %v130, %v131
    %vm133 = vcmp.eq.f32.partialorder %v130, inf
    %v134 = vsel %vm133, %v130, %v132
    %vm135 = vcmp.eq.f32.partialorder %v130, 0.0
    %v136 = vand.u32 %v130, 2147483648
    %v137 = vsel %vm135, %v136, %v134
    %v138 = vld [vmem:[%s5] sm:$0x1]
    %vm139 = vcmp.gt.s32.totalorder %v138, 0
    %v140 = vld [vmem:[%s3] sm:$0xff]
    %v141 = vld [vmem:[%s4] sm:$0x1]
    %142 = vset.pattern.permute.xlu0 0
    %143 = vperm.xlu0 %142, %v140
    %v144 = vpop.permute.xlu0 %143
    %v145 = vlaneseq
    %v146 = vshrl.u32 %v145, 7
    %v147 = vsub.s32 0, %v146
    %v148 = vrot.slane %v141, %v147
    %vm149 = vcmp.eq.s32.totalorder %v144, %v148
    %v150 = vsel %vm139, 1, 0
    %v151 = vlaneseq
    %v152 = vshrl.u32 %v151, 7
    %v153 = vsub.s32 0, %v152
    %v154 = vrot.slane %v150, %v153
    %vm155 = vcmp.eq.s32.totalorder %v154, 1
    %vm156 = vmand %vm149, %vm155
    %vm157 = vmxor %vm149, 1
    %vm158 = vmand %vm157, %vm155
    %v159 = vsel %vm156, %v137, 0.0
    %v160 = vsel %vm158, %v137, 0.0
    %vm161 = vcmask 64512
    %v162 = vsel %vm161, %v159, -inf
    %163 = vmax.xlane.f32.xlu0 %v162
    %v164 = vpop.xlane.xlu0 %163
    %v165 = vsub.f32 %v159, %v164
    %v166 = vmul.f32 %v165, 1.442695
    %v167 = vpow.pop %v166
    %v168 = vsel %vm156, %v167, 0.0
    %v169 = vsel %vm161, %v168, 0.0
    %170 = vadd.xlane.f32.xlu0 %v169
    %v171 = vpop.xlane.xlu0 %170
    %v172 = vadd.f32 %v171, 1e-06
    %v173 = vmul.f32 %v159, %v168
    %v174 = vsel %vm161, %v173, 0.0
    %175 = vadd.xlane.f32.xlu0 %v174
    %v176 = vpop.xlane.xlu0 %175
    %v177 = vrcp.pop %v172
    %v178 = vmul.f32 %v176, %v177
    %v179 = vsub.f32 0.0, %v160
    %v180 = vsel %vm161, %v179, -inf
    %181 = vmax.xlane.f32.xlu0 %v180
    %v182 = vpop.xlane.xlu0 %181
    %v183 = vsub.f32 %v179, %v182
    %v184 = vmul.f32 %v183, 1.442695
    %v185 = vpow.pop %v184
    %v186 = vsel %vm158, %v185, 0.0
    %v187 = vsel %vm161, %v186, 0.0
    %188 = vadd.xlane.f32.xlu0 %v187
    %v189 = vpop.xlane.xlu0 %188
    %v190 = vadd.f32 %v189, 1e-06
    %v191 = vmul.f32 %v160, %v186
    %v192 = vsel %vm161, %v191, 0.0
    %193 = vadd.xlane.f32.xlu0 %v192
    %v194 = vpop.xlane.xlu0 %193
    %v195 = vrcp.pop %v190
    %v196 = vmul.f32 %v194, %v195
    %v197 = vsub.f32 %v196, %v178
    %v198 = vsub.f32 0.0, %v197
    %v199 = vmul.f32 %v198, 1.442695
    %v200 = vpow.pop %v199
    %v201 = vadd.f32 %v200, 1.0
    %v202 = vlog2.pop %v201
    %v203 = vmul.f32 %v202, 0.6931472
    %v204 = vmul.f32 -0.5, %v200
    %v205 = vadd.f32 %v204, 1.0
    %v206 = vmul.f32 %v205, %v200
    %v207 = vand.u32 2147483647, %v200
    %vm208 = vcmp.lt.f32.partialorder %v207, 0.0004427343
    %v209 = vsel %vm208, %v206, %v203
    %vm210 = vcmask 7168
    %211 = vst.msk [vmem:[%s6] sm:$0xff] %vm210, %v209
    %vm212 = vcmp.ge.f32.partialorder %v196, %v178
    %v213 = vsel %vm212, 1, 0
    %v214 = vcvt.s32.f32 %v213
    %215 = vst.msk [vmem:[%s7] sm:$0xff] %vm210, %v214
    // Predicated region
    $region30: #{tpu_custom_call.1} parent=1 // pred_check
      _
    $region31: #{tpu_custom_call.1} parent=1 // pred_check_branch
      %217 = sbr.rel (0) target = $region33
    $region32: #{tpu_custom_call.1} parent=1 // pred_region
      _
    $region33: #{tpu_custom_call.1} parent=1 // pred_fallthru
      _
    // Predicated region
    $region34: #{tpu_custom_call.1} parent=1 // pred_check
      _
    $region35: #{tpu_custom_call.1} parent=1 // pred_check_branch
      %219 = sbr.rel (0) target = $region37
    $region36: #{tpu_custom_call.1} parent=1 // pred_region
      _
    $region37: #{tpu_custom_call.1} parent=1 // pred_fallthru
      _
    // Predicated region
    $region38: #{tpu_custom_call.1} parent=1 // pred_check
      _
    $region39: #{tpu_custom_call.1} parent=1 // pred_check_branch
      %221 = sbr.rel (0) target = $region41
    $region40: #{tpu_custom_call.1} parent=1 // pred_region
      _
    $region41: #{tpu_custom_call.1} parent=1 // pred_fallthru
      _
    // Predicated region
    $region42: #{tpu_custom_call.1} parent=1 // pred_check
      _
    $region43: #{tpu_custom_call.1} parent=1 // pred_check_branch
      %223 = sbr.rel (0) target = $region45
    $region44: #{tpu_custom_call.1} parent=1 // pred_region
      _
    $region45: #{tpu_custom_call.1} parent=1 // pred_fallthru
      _
    %224 = vsyncpa [#allocation3], 1

</llo_original>
